<compile_context>
chip_gen: v7x
topology: tpu7x:2x2x1
jax: 0.10.0
libtpu: 0.0.40
codegen_flags: <defaults>
</compile_context>

<pallas_src>
import jax
import jax.numpy as jnp
from jax.experimental import pallas as pl
from jax.experimental.pallas import tpu as pltpu

IN_CHANNELS = 256
OUT_CHANNELS = 4  # per_pixel * 4 with per_pixel = 1


def _box_head_kernel(x_ref, w_ref, b_ref, o_ref):
    # x_ref: (1, 256, t_hw) NCHW-native pixel columns
    # w_ref: (4, 256), b_ref: (4, 1), o_ref: (1, 4, t_hw)
    acc = jnp.dot(w_ref[...], x_ref[0], preferred_element_type=jnp.float32)
    o_ref[0] = (acc + b_ref[...]).astype(o_ref.dtype)


def box_regression_head(x_nchw, weight, bias, *, max_pixels_per_block=4096):
    """x_nchw: (N, 256, H, W); weight: (4, 256); bias: (4,).

    Returns (N*H*W, 4), identical to the PyTorch forward.
    """
    n, c, h, w = x_nchw.shape
    assert c == IN_CHANNELS
    assert max_pixels_per_block % 128 == 0
    hw = h * w

    # Free view of the NCHW tensor: no data movement in HBM.
    x3d = x_nchw.reshape(n, c, hw)

    if hw <= max_pixels_per_block:
        t_hw = hw                      # full pixel extent -> always a legal block dim
    else:
        t_hw = max_pixels_per_block    # multiple of 128 -> lane-dense blocks
    grid_hw = pl.cdiv(hw, t_hw)        # partial last block (if any) is masked by Pallas

    b2 = bias.reshape(OUT_CHANNELS, 1)

    out = pl.pallas_call(
        _box_head_kernel,
        out_shape=jax.ShapeDtypeStruct((n, OUT_CHANNELS, hw), x_nchw.dtype),
        grid_spec=pltpu.PrefetchScalarGridSpec(
            num_scalar_prefetch=0,
            grid=(n, grid_hw),
            in_specs=[
                pl.BlockSpec((1, IN_CHANNELS, t_hw), lambda b, j: (b, 0, j)),
                pl.BlockSpec((OUT_CHANNELS, IN_CHANNELS), lambda b, j: (0, 0)),
                pl.BlockSpec((OUT_CHANNELS, 1), lambda b, j: (0, 0)),
            ],
            out_specs=pl.BlockSpec((1, OUT_CHANNELS, t_hw), lambda b, j: (b, 0, j)),
        ),
        compiler_params=pltpu.CompilerParams(
            dimension_semantics=("parallel", "parallel"),
        ),
    )(x3d, weight, b2)

    # Tiny epilogue: (N, 4, HW) -> (N, HW, 4) -> (N*HW, 4).  This transposes
    # only the 4-row result (16 bytes/pixel), not the 1 KiB/pixel input.
    return jnp.transpose(out, (0, 2, 1)).reshape(n * hw, OUT_CHANNELS)


if __name__ == "__main__":
    key = jax.random.PRNGKey(0)
    k_x, k_w, k_b = jax.random.split(key, 3)

    # Small spatial shapes; channel count (256) is fixed by the module.
    N, H, W = 2, 8, 8
    x = jax.random.normal(k_x, (N, IN_CHANNELS, H, W), dtype=jnp.float32)

    # Conv2d 1x1 parameters: weight (4, 256, 1, 1) -> (4, 256), bias (4,).
    weight = jax.random.normal(k_w, (OUT_CHANNELS, IN_CHANNELS), dtype=jnp.float32) * 0.02
    bias = jax.random.normal(k_b, (OUT_CHANNELS,), dtype=jnp.float32) * 0.02

    out = box_regression_head(x, weight, bias)
    out = jax.block_until_ready(out)

    # Reference in plain JAX (same math path as PyTorch).
    ref = (jnp.transpose(x, (0, 2, 3, 1)).reshape(-1, IN_CHANNELS) @ weight.T) + bias
    assert out.shape == (N * H * W, OUT_CHANNELS), out.shape
    assert jnp.allclose(out, ref, atol=1e-4, rtol=1e-4)

    # Second check: exercise the multi-block pixel tiling path (HW=256, 128-pixel tiles).
    N2, H2, W2 = 2, 16, 16
    x2 = jax.random.normal(k_x, (N2, IN_CHANNELS, H2, W2), dtype=jnp.float32)
    out2 = jax.block_until_ready(
        box_regression_head(x2, weight, bias, max_pixels_per_block=128))
    ref2 = (jnp.transpose(x2, (0, 2, 3, 1)).reshape(-1, IN_CHANNELS) @ weight.T) + bias
    assert out2.shape == (N2 * H2 * W2, OUT_CHANNELS), out2.shape
    assert jnp.allclose(out2, ref2, atol=1e-4, rtol=1e-4)

    print("KERNEL_OK")
</pallas_src>

<mosaic_0001>
module attributes {stable_mosaic.version = 11 : i64} {
  func.func @_box_head_kernel(%arg0: i32, %arg1: i32, %arg2: memref<1x256x64xf32, #tpu.memory_space<vmem>>, %arg3: memref<4x256xf32, #tpu.memory_space<vmem>>, %arg4: memref<4x1xf32, #tpu.memory_space<vmem>>, %arg5: memref<1x4x64xf32, #tpu.memory_space<vmem>>) attributes {dimension_semantics = [#tpu.dimension_semantics<parallel>, #tpu.dimension_semantics<parallel>], iteration_bounds = array<i64: 2, 1>, scalar_prefetch = 0 : i64, scratch_operands = 0 : i64, tpu.core_type = #tpu.core_type<tc>, window_params = [{transform_indices = @transform_0, window_bounds = array<i64: 1, 256, 64>}, {pipeline_mode = #tpu.pipeline_mode<synchronous>, transform_indices = @transform_1, window_bounds = array<i64: 4, 256>}, {pipeline_mode = #tpu.pipeline_mode<synchronous>, transform_indices = @transform_2, window_bounds = array<i64: 4, 1>}, {transform_indices = @transform_3, window_bounds = array<i64: 1, 4, 64>}]} {
    %c0 = arith.constant 0 : index
    %c0_0 = arith.constant 0 : index
    %0 = vector.load %arg3[%c0, %c0_0] : memref<4x256xf32, #tpu.memory_space<vmem>>, vector<4x256xf32>
    %c0_1 = arith.constant 0 : index
    %c0_2 = arith.constant 0 : index
    %c0_3 = arith.constant 0 : index
    %1 = vector.load %arg2[%c0_1, %c0_2, %c0_3] : memref<1x256x64xf32, #tpu.memory_space<vmem>>, vector<1x256x64xf32>
    %2 = vector.shape_cast %1 : vector<1x256x64xf32> to vector<256x64xf32>
    %cst = arith.constant dense<0.000000e+00> : vector<4x64xf32>
    %3 = tpu.matmul %0, %2, %cst {dimension_numbers = #tpu.dot_dimension_numbers<[1], [0], [0], [1], [0, 0, 1, 1], [], []>} : vector<4x256xf32>, vector<256x64xf32>, vector<4x64xf32> -> vector<4x64xf32>
    %c0_4 = arith.constant 0 : index
    %c0_5 = arith.constant 0 : index
    %4 = vector.load %arg4[%c0_4, %c0_5] : memref<4x1xf32, #tpu.memory_space<vmem>>, vector<4x1xf32>
    %5 = vector.broadcast %4 : vector<4x1xf32> to vector<4x64xf32>
    %6 = arith.addf %3, %5 : vector<4x64xf32>
    %c0_6 = arith.constant 0 : index
    %c0_7 = arith.constant 0 : index
    %c0_8 = arith.constant 0 : index
    %7 = vector.load %arg5[%c0_6, %c0_7, %c0_8] : memref<1x4x64xf32, #tpu.memory_space<vmem>>, vector<1x4x64xf32>
    %8 = vector.shape_cast %7 : vector<1x4x64xf32> to vector<4x64xf32>
    %9 = vector.shape_cast %6 : vector<4x64xf32> to vector<1x4x64xf32>
    tpu.vector_store %arg5[%c0_6, %c0_7, %c0_8], %9 {strides = array<i32>} : memref<1x4x64xf32, #tpu.memory_space<vmem>>, vector<1x4x64xf32>,
    return
  }
  func.func @transform_0(%arg0: i32, %arg1: i32) -> (i32, i32, i32) {
    %c0_i32 = arith.constant 0 : i32
    %c0_i32_0 = arith.constant 0 : i32
    return %arg0, %c0_i32, %arg1 : i32, i32, i32
  }
  func.func @transform_1(%arg0: i32, %arg1: i32) -> (i32, i32) {
    %c0_i32 = arith.constant 0 : i32
    %c0_i32_0 = arith.constant 0 : i32
    %c0_i32_1 = arith.constant 0 : i32
    return %c0_i32, %c0_i32_0 : i32, i32
  }
  func.func @transform_2(%arg0: i32, %arg1: i32) -> (i32, i32) {
    %c0_i32 = arith.constant 0 : i32
    %c0_i32_0 = arith.constant 0 : i32
    %c0_i32_1 = arith.constant 0 : i32
    return %c0_i32, %c0_i32_0 : i32, i32
  }
  func.func @transform_3(%arg0: i32, %arg1: i32) -> (i32, i32, i32) {
    %c0_i32 = arith.constant 0 : i32
    %c0_i32_0 = arith.constant 0 : i32
    return %arg0, %c0_i32, %arg1 : i32, i32, i32
  }
}

</mosaic_0001>

<llo_original>
// kernel: tpu_custom_call.1
$region0: #{tpu_custom_call.1}
  #allocation0 [shape = 'u32[]', space=smem, size = 0x4, offset = 0x4, fixed_abs, tag = 'smem constant byte address 0x4 - core index']
  #allocation1 [shape = 'u32[144,128]{1,0:T(1,128)}', space=vmem, size = 0x12000, scoped, tag = 'internal scratch']
  %s0 = inlined_call_operand.vmem [shape: f32[2,256,64], index: 0, kind: input, shape index: {}]
  %s1 = inlined_call_operand.vmem [shape: f32[4,256], index: 1, kind: input, shape index: {}]
  %s2 = inlined_call_operand.vmem [shape: f32[4,1], index: 2, kind: input, shape index: {}]
  %s3 = inlined_call_operand.hbm [shape: f32[2,4,64], index: 3, kind: output, shape index: {}]
  %s4 = sld [smem:[#allocation0]]
  $region45: #{tpu_custom_call.1} parent=0
    _
  %s6 = ssub.s32 1, %s4
  %s7 = scalar_select 0, %s6, %s4
  $region1: #{tpu_custom_call.1} parent=0
    #allocation2 [shape = 'u8[4096]{0}', space=vmem, size = 0x1000, scoped, tag = 'output window, operand 0']
    #allocation3 [shape = 's32[2]{0}', space=sflag, size = 0x8, scoped, tag = 'scoped memory for tpu_custom_call.1']
    %8 = vsyncpa [#allocation3], 0
    %s9 = scalar_lea.sflag [#allocation3], 1
    %10 = vsyncpa %s9, 0
    loop: start=0, step=1, limit=4
    $region2: #{tpu_custom_call.1} parent=1 // loop_pre_header
      _
    $region3: #{tpu_custom_call.1} parent=1 // loop_header
      %s12 = sphi 0, %s16
      %p13 = scmp.ge.s32.totalorder %s12, 4
      %s19 = sphi 0, %s31
      %s20 = sphi 0, %s27
      %s21 = sphi 0, %s19
      %s22 = sphi 0, %s20
      %s23 = sphi 0, %s21
      %s24 = sphi 0, %s22
      %s36 = sphi 0, %s38
      %s39 = sphi 0, %s36
      %s40 = sphi 0, %s39
      %s56 = sphi 0, %s40
      %s60 = sphi 0, %s60
      %s62 = sphi 0, %s60
      %s63 = sphi 0, %s62
      %s77 = sphi 0, %s63
      %s81 = sphi 0, %s81
      %s83 = sphi 0, %s81
      %s84 = sphi 0, %s83
      %s98 = sphi 0, %s84
      %s106 = sphi 0, %s108
      %s109 = sphi 0, %s106
      %s110 = sphi 0, %s109
      %s126 = sphi 0, %s110
    $region4: #{tpu_custom_call.1} parent=1 // loop_header_branch
      %15 = sbr.rel (%p13) target = $region8
    $region5: #{tpu_custom_call.1} parent=1 // loop_body
      %s17 = ssub.s32 %s12, 1
      %s18 = ssub.s32 %s12, 2
      %s25 = sadd.s32 1, %s20
      %p26 = scmp.ge.s32.totalorder %s25, 1
      %s27 = scalar_select %p26, 0, %s25
      %s28 = sadd.s32 1, %s19
      %s29 = scalar_select %p26, %s28, %s19
      %p30 = scmp.ge.s32.totalorder %s29, 2
      %s31 = scalar_select %p30, 0, %s29
      %s32 = ssub.s32 %s19, %s31
      %s33 = ssub.s32 %s20, %s27
      %s34 = sor.u32 %s32, %s33
      %p35 = scmp.eq.s32.totalorder %s34, 0
      %s37 = sadd.s32 %s36, 1
      %s38 = scalar_select %p35, %s36, %s37
      %p41 = pneg %p35
      %p42 = scmp.eq.s32.totalorder %s12, 1
      %p43 = por %p41, %p42
      %p44 = scmp.ne.s32.totalorder %s36, %s39
      %p45 = scmp.eq.s32.totalorder %s12, 0
      %p46 = por %p44, %p45
      %p47 = scmp.ne.s32.totalorder %s36, %s39
      %p48 = scmp.eq.s32.totalorder %s17, 1
      %p49 = por %p47, %p48
      %p50 = scmp.ne.s32.totalorder %s39, %s40
      %p51 = scmp.eq.s32.totalorder %s17, 0
      %p52 = por %p50, %p51
      %p53 = scmp.ne.s32.totalorder %s39, %s40
      %p54 = scmp.eq.s32.totalorder %s18, 1
      %p55 = por %p53, %p54
      %p57 = scmp.ne.s32.totalorder %s40, %s56
      %p58 = scmp.eq.s32.totalorder %s18, 0
      %p59 = por %p57, %p58
      %s61 = sadd.s32 %s60, 1
      %p64 = scmp.eq.s32.totalorder %s12, 1
      %p65 = scmp.ne.s32.totalorder %s60, %s62
      %p66 = scmp.eq.s32.totalorder %s12, 0
      %p67 = por %p65, %p66
      %p68 = scmp.ne.s32.totalorder %s60, %s62
      %p69 = scmp.eq.s32.totalorder %s17, 1
      %p70 = por %p68, %p69
      %p71 = scmp.ne.s32.totalorder %s62, %s63
      %p72 = scmp.eq.s32.totalorder %s17, 0
      %p73 = por %p71, %p72
      %p74 = scmp.ne.s32.totalorder %s62, %s63
      %p75 = scmp.eq.s32.totalorder %s18, 1
      %p76 = por %p74, %p75
      %p78 = scmp.ne.s32.totalorder %s63, %s77
      %p79 = scmp.eq.s32.totalorder %s18, 0
      %p80 = por %p78, %p79
      %s82 = sadd.s32 %s81, 1
      %p85 = scmp.eq.s32.totalorder %s12, 1
      %p86 = scmp.ne.s32.totalorder %s81, %s83
      %p87 = scmp.eq.s32.totalorder %s12, 0
      %p88 = por %p86, %p87
      %p89 = scmp.ne.s32.totalorder %s81, %s83
      %p90 = scmp.eq.s32.totalorder %s17, 1
      %p91 = por %p89, %p90
      %p92 = scmp.ne.s32.totalorder %s83, %s84
      %p93 = scmp.eq.s32.totalorder %s17, 0
      %p94 = por %p92, %p93
      %p95 = scmp.ne.s32.totalorder %s83, %s84
      %p96 = scmp.eq.s32.totalorder %s18, 1
      %p97 = por %p95, %p96
      %p99 = scmp.ne.s32.totalorder %s84, %s98
      %p100 = scmp.eq.s32.totalorder %s18, 0
      %p101 = por %p99, %p100
      %s102 = ssub.s32 %s19, %s31
      %s103 = ssub.s32 %s20, %s27
      %s104 = sor.u32 %s102, %s103
      %p105 = scmp.eq.s32.totalorder %s104, 0
      %s107 = sadd.s32 %s106, 1
      %s108 = scalar_select %p105, %s106, %s107
      %p111 = pneg %p105
      %p112 = scmp.eq.s32.totalorder %s12, 1
      %p113 = por %p111, %p112
      %p114 = scmp.ne.s32.totalorder %s106, %s109
      %p115 = scmp.eq.s32.totalorder %s12, 0
      %p116 = por %p114, %p115
      %p117 = scmp.ne.s32.totalorder %s106, %s109
      %p118 = scmp.eq.s32.totalorder %s17, 1
      %p119 = por %p117, %p118
      %p120 = scmp.ne.s32.totalorder %s109, %s110
      %p121 = scmp.eq.s32.totalorder %s17, 0
      %p122 = por %p120, %p121
      %p123 = scmp.ne.s32.totalorder %s109, %s110
      %p124 = scmp.eq.s32.totalorder %s18, 1
      %p125 = por %p123, %p124
      %p127 = scmp.ne.s32.totalorder %s110, %s126
      %p128 = scmp.eq.s32.totalorder %s18, 0
      %p129 = por %p127, %p128
      %p130 = scmp.le.s32.totalorder 1, %s12
      %p131 = scmp.lt.s32.totalorder %s12, 3
      %p132 = pnand %p130, %p131
      %p133 = pneg %p132
      // Predicated region
      $region9: #{tpu_custom_call.1} parent=5 // pred_check
        _
      $region10: #{tpu_custom_call.1} parent=5 // pred_check_branch
        %135 = sbr.rel (%p132) target = $region12
      $region11: #{tpu_custom_call.1} parent=5 // pred_region
        %s136 = ssub.s32 %s12, 1
        // Predicated region
        $region13: #{tpu_custom_call.1} parent=11 // pred_check
          %p137 = pneg %p73
        $region14: #{tpu_custom_call.1} parent=11 // pred_check_branch
          %139 = sbr.rel (%p137) target = $region16
        $region15: #{tpu_custom_call.1} parent=11 // pred_region
          _
        $region16: #{tpu_custom_call.1} parent=11 // pred_fallthru
          _
        // Predicated region
        $region17: #{tpu_custom_call.1} parent=11 // pred_check
          %p140 = pneg %p94
        $region18: #{tpu_custom_call.1} parent=11 // pred_check_branch
          %142 = sbr.rel (%p140) target = $region20
        $region19: #{tpu_custom_call.1} parent=11 // pred_region
          _
        $region20: #{tpu_custom_call.1} parent=11 // pred_fallthru
          _
      $region12: #{tpu_custom_call.1} parent=5 // pred_fallthru
        _
      %p143 = scmp.lt.s32.totalorder %s12, 2
      // Predicated region
      $region21: #{tpu_custom_call.1} parent=5 // pred_check
        %p144 = pneg %p143
      $region22: #{tpu_custom_call.1} parent=5 // pred_check_branch
        %146 = sbr.rel (%p144) target = $region24
      $region23: #{tpu_custom_call.1} parent=5 // pred_region
        // Predicated region
        $region25: #{tpu_custom_call.1} parent=23 // pred_check
          %p147 = pneg %p46
        $region26: #{tpu_custom_call.1} parent=23 // pred_check_branch
          %149 = sbr.rel (%p147) target = $region28
        $region27: #{tpu_custom_call.1} parent=23 // pred_region
          %p150 = scmp.lt.s32.totalorder %s19, 1
          %s151 = scalar_select %p150, %s19, 1
          %p152 = scmp.lt.s32.totalorder %s20, 0
          %s153 = scalar_select %p152, %s20, 0
          %s154 = smul.addr %s151, 32
          %s155 = sadd.s32 %s153, %s154
          %s156 = smul.addr %s155, 8
          %s157 = scalar_lea.vmem %s0, %s156
        $region28: #{tpu_custom_call.1} parent=23 // pred_fallthru
          _
      $region24: #{tpu_custom_call.1} parent=5 // pred_fallthru
        _
      %p158 = scmp.le.s32.totalorder 1, %s12
      %p159 = scmp.lt.s32.totalorder %s12, 3
      %p160 = pnand %p158, %p159
      %p161 = pneg %p160
      // Predicated region
      $region29: #{tpu_custom_call.1} parent=5 // pred_check
        _
      $region30: #{tpu_custom_call.1} parent=5 // pred_check_branch
        %163 = sbr.rel (%p160) target = $region32
      $region31: #{tpu_custom_call.1} parent=5 // pred_region
        %s164 = ssub.s32 %s12, 1
        %p165 = scmp.lt.s32.totalorder %s21, 1
        %s166 = scalar_select %p165, %s21, 1
        %p167 = scmp.lt.s32.totalorder %s22, 0
        %s168 = scalar_select %p167, %s22, 0
        %s169 = smul.addr %s166, 32
        %s170 = sadd.s32 %s168, %s169
        %s171 = smul.addr %s170, 8
        %s172 = scalar_lea.vmem %s0, %s171
        %p173 = pneg %p52
        %p174 = pneg %p49
        %p175 = pneg %p73
        %p176 = pneg %p70
        %p177 = pneg %p94
        %p178 = pneg %p91
        %p179 = pneg %p122
        %p180 = pneg %p119
        %s181 = sand.u32 %s109, 1
        %s182 = scalar_lea.sflag [#allocation3], %s181
        %s183 = sand.u32 %s109, 1
        %s184 = smul.addr %s183, 4
        %s185 = scalar_lea.vmem [#allocation2], %s184
        %p186 = scmp.lt.s32.totalorder %s21, 1
        %s187 = scalar_select %p186, %s21, 1
        %p188 = scmp.lt.s32.totalorder %s22, 0
        %s189 = scalar_select %p188, %s22, 0
        %s190 = smul.addr %s187, 32
        %s191 = sadd.s32 %s189, %s190
        %s192 = smul.addr %s191, 8
        %s193 = scalar_lea.vmem %s0, %s192
        %v194 = vld [vmem:[%s1] sm:$0xff]
        %v195 = vld [vmem:[%s193] sm:$0xff]
        %v196 = vld [vmem:[%s193 + $0x8] sm:$0xff]
        %v197 = vld [vmem:[%s193 + $0x10] sm:$0xff]
        %v198 = vld [vmem:[%s193 + $0x18] sm:$0xff]
        %v199 = vld [vmem:[%s193 + $0x20] sm:$0xff]
        %v200 = vld [vmem:[%s193 + $0x28] sm:$0xff]
        %v201 = vld [vmem:[%s193 + $0x30] sm:$0xff]
        %v202 = vld [vmem:[%s193 + $0x38] sm:$0xff]
        %v203 = vld [vmem:[%s193 + $0x40] sm:$0xff]
        %v204 = vld [vmem:[%s193 + $0x48] sm:$0xff]
        %v205 = vld [vmem:[%s193 + $0x50] sm:$0xff]
        %v206 = vld [vmem:[%s193 + $0x58] sm:$0xff]
        %v207 = vld [vmem:[%s193 + $0x60] sm:$0xff]
        %v208 = vld [vmem:[%s193 + $0x68] sm:$0xff]
        %v209 = vld [vmem:[%s193 + $0x70] sm:$0xff]
        %v210 = vld [vmem:[%s193 + $0x78] sm:$0xff]
        %v211 = vld [vmem:[%s193 + $0x80] sm:$0xff]
        %v212 = vld [vmem:[%s193 + $0x88] sm:$0xff]
        %v213 = vld [vmem:[%s193 + $0x90] sm:$0xff]
        %v214 = vld [vmem:[%s193 + $0x98] sm:$0xff]
        %v215 = vld [vmem:[%s193 + $0xa0] sm:$0xff]
        %v216 = vld [vmem:[%s193 + $0xa8] sm:$0xff]
        %v217 = vld [vmem:[%s193 + $0xb0] sm:$0xff]
        %v218 = vld [vmem:[%s193 + $0xb8] sm:$0xff]
        %v219 = vld [vmem:[%s193 + $0xc0] sm:$0xff]
        %v220 = vld [vmem:[%s193 + $0xc8] sm:$0xff]
        %v221 = vld [vmem:[%s193 + $0xd0] sm:$0xff]
        %v222 = vld [vmem:[%s193 + $0xd8] sm:$0xff]
        %v223 = vld [vmem:[%s193 + $0xe0] sm:$0xff]
        %v224 = vld [vmem:[%s193 + $0xe8] sm:$0xff]
        %v225 = vld [vmem:[%s193 + $0xf0] sm:$0xff]
        %v226 = vld [vmem:[%s193 + $0xf8] sm:$0xff]
        %v227 = vld [vmem:[%s2] sm:$0xf]
        %229 = vset.pattern.permute.xlu0 0
        %230 = vperm.xlu0 %229, %v227
        %v231 = vpop.permute.xlu0 %230
        %v234 = vcombine.high %v194, %v194
        %236 = vmatprep.subr.mxu0 0.0
        %237 = vmatpush1.msra.mxu0 %v195
        %238 = vmatprep.subr.mxu0 0.0
        %239 = vmatpush1.msra.mxu0 %v196
        %240 = vmatprep.subr.mxu0 0.0
        %241 = vmatpush1.msra.mxu0 %v197
        %242 = vmatprep.subr.mxu0 0.0
        %243 = vmatpush1.msra.mxu0 %v198
        %244 = vmatprep.subr.mxu0 0.0
        %245 = vmatpush1.msra.mxu0 %v199
        %246 = vmatprep.subr.mxu0 0.0
        %247 = vmatpush1.msra.mxu0 %v200
        %248 = vmatprep.subr.mxu0 0.0
        %249 = vmatpush1.msra.mxu0 %v201
        %250 = vmatprep.subr.mxu0 0.0
        %251 = vmatpush1.msra.mxu0 %v202
        %252 = vmatprep.subr.mxu0 0.0
        %253 = vmatpush1.msra.mxu0 %v203
        %254 = vmatprep.subr.mxu0 0.0
        %255 = vmatpush1.msra.mxu0 %v204
        %256 = vmatprep.subr.mxu0 0.0
        %257 = vmatpush1.msra.mxu0 %v205
        %258 = vmatprep.subr.mxu0 0.0
        %259 = vmatpush1.msra.mxu0 %v206
        %260 = vmatprep.subr.mxu0 0.0
        %261 = vmatpush1.msra.mxu0 %v207
        %262 = vmatprep.subr.mxu0 0.0
        %263 = vmatpush1.msra.mxu0 %v208
        %264 = vmatprep.subr.mxu0 0.0
        %265 = vmatpush1.msra.mxu0 %v209
        %266 = vmatprep.subr.mxu0 0.0
        %267 = vmatpush1.msra.mxu0 %v210
        %268 = vmatprep.subr.mxu0 0.0
        %269 = vmatpush1.msra.mxu0 %v211
        %270 = vmatprep.subr.mxu0 0.0
        %271 = vmatpush1.msra.mxu0 %v212
        %272 = vmatprep.subr.mxu0 0.0
        %273 = vmatpush1.msra.mxu0 %v213
        %274 = vmatprep.subr.mxu0 0.0
        %275 = vmatpush1.msra.mxu0 %v214
        %276 = vmatprep.subr.mxu0 0.0
        %277 = vmatpush1.msra.mxu0 %v215
        %278 = vmatprep.subr.mxu0 0.0
        %279 = vmatpush1.msra.mxu0 %v216
        %280 = vmatprep.subr.mxu0 0.0
        %281 = vmatpush1.msra.mxu0 %v217
        %282 = vmatprep.subr.mxu0 0.0
        %283 = vmatpush1.msra.mxu0 %v218
        %284 = vmatprep.subr.mxu0 0.0
        %285 = vmatpush1.msra.mxu0 %v219
        %286 = vmatprep.subr.mxu0 0.0
        %287 = vmatpush1.msra.mxu0 %v220
        %288 = vmatprep.subr.mxu0 0.0
        %289 = vmatpush1.msra.mxu0 %v221
        %290 = vmatprep.subr.mxu0 0.0
        %291 = vmatpush1.msra.mxu0 %v222
        %292 = vmatprep.subr.mxu0 0.0
        %293 = vmatpush1.msra.mxu0 %v223
        %294 = vmatprep.subr.mxu0 0.0
        %295 = vmatpush1.msra.mxu0 %v224
        %296 = vmatprep.subr.mxu0 0.0
        %297 = vmatpush1.msra.mxu0 %v225
        %298 = vmatprep.subr.mxu0 0.0
        %299 = vmatpush1.msra.mxu0 %v226
        %300 = vmatprep.mubr.f32.mxu0 %v234
        %301 = vmatmul.mubr.f32.gmra.mrb[0].mxu0 %v194
        %v302 = vpop.f32.mrb[0].mxu0
        %v303 = vadd.f32 %v231, %v302
        %v304 = vpop.f32.mrb[0].mxu0
        %305 = vdwg.mxu0
        %vm306 = vcmask 519168
        %307 = vst.msk [vmem:[%s185] sm:$0xf] %vm306, %v303
        %s308 = sand.u32 %s109, 1
        %s309 = scalar_lea.sflag [#allocation3], %s308
        %s310 = sand.u32 %s109, 1
        %s311 = smul.addr %s310, 4
        %s312 = scalar_lea.vmem [#allocation2], %s311
        // Predicated region
        $region33: #{tpu_custom_call.1} parent=31 // pred_check
          %p313 = pneg %p119
        $region34: #{tpu_custom_call.1} parent=31 // pred_check_branch
          %315 = sbr.rel (%p313) target = $region36
        $region35: #{tpu_custom_call.1} parent=31 // pred_region
          %s317 = ssub.s32 64, 64
          %318 = vsyncadd %s309, %s317
          %s319 = sadd.s32 %s22, %s21
          %s320 = smul.addr %s319, 64
          %s321 = scalar_lea.hbm %s3, %s320
          %s323 = sshll.u32 %s312, 4
          %s324 = int_to_ptr.vmem [resolvable:$true] %s323
          %326 = dma.vmem_to_hbm [thread:$0]  %s324, 64, %s321, %s309
        $region36: #{tpu_custom_call.1} parent=31 // pred_fallthru
          _
      $region32: #{tpu_custom_call.1} parent=5 // pred_fallthru
        _
      %p327 = scmp.le.s32.totalorder 2, %s12
      // Predicated region
      $region37: #{tpu_custom_call.1} parent=5 // pred_check
        %p328 = pneg %p327
      $region38: #{tpu_custom_call.1} parent=5 // pred_check_branch
        %330 = sbr.rel (%p328) target = $region40
      $region39: #{tpu_custom_call.1} parent=5 // pred_region
        %s331 = ssub.s32 %s12, 2
        // Predicated region
        $region41: #{tpu_custom_call.1} parent=39 // pred_check
          %p332 = pneg %p125
        $region42: #{tpu_custom_call.1} parent=39 // pred_check_branch
          %334 = sbr.rel (%p332) target = $region44
        $region43: #{tpu_custom_call.1} parent=39 // pred_region
          %s335 = sand.u32 %s110, 1
          %s336 = scalar_lea.sflag [#allocation3], %s335
          %s337 = sand.u32 %s110, 1
          %s338 = smul.addr %s337, 4
          %s339 = scalar_lea.vmem [#allocation2], %s338
          %340 = dma.done %s336, 64
        $region44: #{tpu_custom_call.1} parent=39 // pred_fallthru
          _
      $region40: #{tpu_custom_call.1} parent=5 // pred_fallthru
        _
    $region6: #{tpu_custom_call.1} parent=1 // loop_footer
      %s16 = sadd.s32 1, %s12
    $region7: #{tpu_custom_call.1} parent=1 // loop_footer_branch
      %11 = sbr.rel target = $region3
    $region8: #{tpu_custom_call.1} parent=1 // loop_exit
      _
    %341 = vsyncpa [#allocation3], 1
    %s342 = scalar_lea.sflag [#allocation3], 1
    %343 = vsyncpa %s342, 1

</llo_original>
